<compile_context>
chip_gen: v7x
topology: tpu7x:2x2x1
jax: 0.10.0
libtpu: 0.0.40
codegen_flags: <defaults>
</compile_context>

<pallas_src>
import jax
import jax.numpy as jnp
from jax.experimental import pallas as pl
from jax.experimental.pallas import tpu as pltpu


def _round_up(v, m):
    return (v + m - 1) // m * m


def _matmul_stats_kernel(b_ref, a_ref, y_ref, stats_ref):
    # b_ref    : (Crows_pad, Kd_pad)   bf16  block-diagonal per-phase weights (tiny)
    # a_ref    : (Kd_pad, TM)          bf16  stacked per-phase input patches, one M tile
    # y_ref    : (Crows_pad, TM)       bf16  conv-transpose output tile (cast only at store)
    # stats_ref: (2, Crows_pad, 128)   f32   lane-partial sum / sum-of-squares for this M tile
    y = jnp.dot(b_ref[...], a_ref[...], preferred_element_type=jnp.float32)
    c, tm = y.shape
    s1 = jnp.zeros((c, 128), jnp.float32)
    s2 = jnp.zeros((c, 128), jnp.float32)
    for off in range(0, tm, 128):          # static unroll, aligned lane slices (VPU only)
        blk = y[:, off:off + 128]
        s1 = s1 + blk
        s2 = s2 + blk * blk
    stats_ref[0] = s1
    stats_ref[1] = s2
    y_ref[...] = y.astype(y_ref.dtype)


def _bn_lrelu_kernel(ss_ref, y_ref, o_ref):
    # ss_ref: (2, Crows_pad, 1) f32 -- [0] = gamma/std, [1] = beta - mean*gamma/std (pre-folded)
    scale = ss_ref[0]
    shift = ss_ref[1]
    yn = y_ref[...].astype(jnp.float32) * scale + shift
    o_ref[...] = jnp.where(yn > 0, yn, 0.01 * yn)


def up_forward(x, weight, bias, gamma, beta, *, stride, padding):
    """x: (N, Cin, H, W) NCHW; weight: (Cin, Cout, K, K) (PyTorch ConvTranspose2d layout).

    `bias` is accepted for interface parity but is exactly cancelled by training-mode
    BatchNorm (it only shifts the per-channel mean), so it is not applied.
    """
    del bias
    N, Cin, H, W = x.shape
    _, Cout, K, _ = weight.shape
    s, p = stride, padding
    OH = (H - 1) * s - 2 * p + K
    OW = (W - 1) * s - 2 * p + K

    # TODO(synk): shapes with K % stride != 0 need a dilated-im2col fallback, and very large
    # contractions (Cin*Kj*Kj*s*s >> VMEM tile budget) would need a K-split grid axis again.
    assert K % s == 0 and (K - 2 * p) % s == 0, \
        "phase decomposition requires K % stride == 0 and (K - 2*padding) % stride == 0"

    Kj = K // s                     # kernel taps per phase per spatial axis
    P = s * s                       # number of output phases
    OHp, OWp = OH // s, OW // s
    Mph = N * OHp * OWp             # output pixels per phase
    Kd = Cin * Kj * Kj              # contraction size per phase
    Kd_all = P * Kd                 # folded contraction size (block-diagonal)
    Crows = P * Cout                # folded output rows

    # Lane/MXU-friendly padding. K is NOT padded to 128 (the block takes the full K dim, so
    # only the bf16 sublane multiple of 16 is needed); rows padded to the bf16 sublane tile.
    Kd_pad = _round_up(Kd_all, 16)
    Crows_pad = _round_up(Crows, 16)

    # M tiling: multiples of 128; aim for large lane-dense tiles but keep >=2 M tiles when
    # possible so both v7x TensorCores get work.
    TM = min(2048, _round_up(Mph, 128))
    if _round_up(Mph, TM) // TM < 2 and TM > 128:
        TM = max(128, (TM // 2) // 128 * 128)
    M_pad = _round_up(Mph, TM)
    n_m = M_pad // TM

    # Pad input once (already in bf16) so every phase's shifted slice is in range (zeros outside).
    pad_lo = Kj - 1
    pad_hi_h = max(0, (OH - 1 + p) // s - (H - 1))
    pad_hi_w = max(0, (OW - 1 + p) // s - (W - 1))
    xp = jnp.pad(x.astype(jnp.bfloat16),
                 ((0, 0), (0, 0), (pad_lo, pad_hi_h), (pad_lo, pad_hi_w)))

    # Build stacked patches A_all (P*Kd, Mph) and block-diagonal weights B_all (P*Cout, P*Kd).
    # Phases are ordered by output residue (oh0, ow0) so the epilogue is a plain reshape.
    a_blocks = []
    b_all = jnp.zeros((Crows_pad, Kd_pad), jnp.bfloat16)
    for oh0 in range(s):
        ph = (oh0 + p) % s          # kernel-tap row residue feeding this output row residue
        qh0 = (oh0 + p) // s
        for ow0 in range(s):
            pw = (ow0 + p) % s
            qw0 = (ow0 + p) // s
            p_idx = oh0 * s + ow0
            patches = []
            for j in range(Kj):
                hs = qh0 + pad_lo - j
                for l in range(Kj):
                    ws = qw0 + pad_lo - l
                    patches.append(xp[:, :, hs:hs + OHp, ws:ws + OWp])  # (N, Cin, OHp, OWp)
            pt = jnp.stack(patches, axis=0)                             # (Kj*Kj, N, Cin, OHp, OWp)
            a_blocks.append(pt.transpose(2, 0, 1, 3, 4).reshape(Kd, Mph))
            wsub = weight[:, :, ph::s, pw::s].astype(jnp.bfloat16)      # taps kh = ph + s*j
            b_blk = wsub.transpose(1, 0, 2, 3).reshape(Cout, Kd)
            b_all = b_all.at[p_idx * Cout:(p_idx + 1) * Cout,
                             p_idx * Kd:(p_idx + 1) * Kd].set(b_blk)

    a_all = jnp.concatenate(a_blocks, axis=0)                           # (P*Kd, Mph) bf16
    a_all = jnp.pad(a_all, ((0, Kd_pad - Kd_all), (0, M_pad - Mph)))

    # Pass 1: one block-diagonal matmul per M tile (bf16 in, f32 MXU acc) + per-tile lane-partial
    # per-row stats.  Single K step -> no resident accumulator / init needed.
    y_bf, stats = pl.pallas_call(
        _matmul_stats_kernel,
        out_shape=(
            jax.ShapeDtypeStruct((Crows_pad, M_pad), jnp.bfloat16),
            jax.ShapeDtypeStruct((n_m, 2, Crows_pad, 128), jnp.float32),
        ),
        grid=(n_m,),
        in_specs=[
            pl.BlockSpec((Crows_pad, Kd_pad), lambda m: (0, 0)),
            pl.BlockSpec((Kd_pad, TM), lambda m: (0, m)),
        ],
        out_specs=(
            pl.BlockSpec((Crows_pad, TM), lambda m: (0, m)),
            pl.BlockSpec((None, 2, Crows_pad, 128), lambda m: (m, 0, 0, 0)),
        ),
        compiler_params=pltpu.CompilerParams(dimension_semantics=("parallel",)),
    )(b_all, a_all)

    # Global batch statistics over all N*OH*OW pixels -> per-channel scale/shift (tiny XLA).
    # Padded K/M regions are exactly zero, so they contribute nothing to the sums.
    cnt = jnp.float32(N * OH * OW)
    row_sum = jnp.sum(stats[:, 0], axis=(0, 2))                         # (Crows_pad,)
    row_sq = jnp.sum(stats[:, 1], axis=(0, 2))
    ch_sum = row_sum[:Crows].reshape(P, Cout).sum(axis=0)               # fold phases per channel
    ch_sq = row_sq[:Crows].reshape(P, Cout).sum(axis=0)
    mean = ch_sum / cnt
    var = jnp.maximum(ch_sq / cnt - mean * mean, 0.0)
    scale_c = gamma.astype(jnp.float32) * jax.lax.rsqrt(var + 1e-5)
    shift_c = beta.astype(jnp.float32) - mean * scale_c
    scale_rows = jnp.pad(jnp.tile(scale_c, P), (0, Crows_pad - Crows))
    shift_rows = jnp.pad(jnp.tile(shift_c, P), (0, Crows_pad - Crows))
    ss = jnp.stack([scale_rows, shift_rows], axis=0).reshape(2, Crows_pad, 1)

    # Pass 2: normalize + LeakyReLU; fully parallel grid, lane-dense stores, f32 output.
    yn = pl.pallas_call(
        _bn_lrelu_kernel,
        out_shape=jax.ShapeDtypeStruct((Crows_pad, M_pad), jnp.float32),
        grid=(n_m,),
        in_specs=[
            pl.BlockSpec((2, Crows_pad, 1), lambda m: (0, 0, 0)),
            pl.BlockSpec((Crows_pad, TM), lambda m: (0, m)),
        ],
        out_specs=pl.BlockSpec((Crows_pad, TM), lambda m: (0, m)),
        compiler_params=pltpu.CompilerParams(dimension_semantics=("parallel",)),
    )(ss, y_bf)

    # Phase interleave: single reshape + transpose (rows are ordered by (oh0, ow0, cout)).
    z = yn[:Crows, :Mph].reshape(s, s, Cout, N, OHp, OWp)
    out = z.transpose(3, 2, 4, 0, 5, 1).reshape(N, Cout, OH, OW)
    return out


def _reference(x, weight, bias, gamma, beta, *, stride, padding):
    """Pure-JAX/XLA reference matching PyTorch ConvTranspose2d + train-mode BN + LeakyReLU."""
    Cin, Cout, K, _ = weight.shape
    w_conv = weight.transpose(1, 0, 2, 3)[:, :, ::-1, ::-1]   # (Cout, Cin, K, K), flipped
    y = jax.lax.conv_general_dilated(
        x, w_conv, window_strides=(1, 1),
        padding=[(K - 1 - padding, K - 1 - padding)] * 2,
        lhs_dilation=(stride, stride),
        dimension_numbers=("NCHW", "OIHW", "NCHW"),
    ) + bias.reshape(1, Cout, 1, 1)
    mean = y.mean(axis=(0, 2, 3), keepdims=True)
    var = ((y - mean) ** 2).mean(axis=(0, 2, 3), keepdims=True)
    yn = (y - mean) * jax.lax.rsqrt(var + 1e-5)
    yn = yn * gamma.reshape(1, Cout, 1, 1) + beta.reshape(1, Cout, 1, 1)
    return jnp.where(yn > 0, yn, 0.01 * yn)


if __name__ == "__main__":
    # up(dim_in=4, dim_out=8, kernel_size=4, stride=2, padding=1) -> 2x spatial upsample
    N, Cin, H, W = 2, 4, 16, 16
    Cout, K, stride, padding = 8, 4, 2, 1

    key = jax.random.PRNGKey(0)
    kx, kw, kb = jax.random.split(key, 3)
    x = jax.random.normal(kx, (N, Cin, H, W), jnp.float32)
    weight = jax.random.normal(kw, (Cin, Cout, K, K), jnp.float32) * 0.1  # ConvTranspose2d weight
    bias = jax.random.normal(kb, (Cout,), jnp.float32) * 0.1
    gamma = jnp.ones((Cout,), jnp.float32)   # BatchNorm2d default affine params
    beta = jnp.zeros((Cout,), jnp.float32)

    y = up_forward(x, weight, bias, gamma, beta, stride=stride, padding=padding)
    y = jax.block_until_ready(y)

    OH = (H - 1) * stride - 2 * padding + K
    OW = (W - 1) * stride - 2 * padding + K
    assert y.shape == (N, Cout, OH, OW), y.shape

    y_ref = _reference(x, weight, bias, gamma, beta, stride=stride, padding=padding)
    assert jnp.allclose(y, y_ref, atol=3e-2, rtol=3e-2), float(jnp.max(jnp.abs(y - y_ref)))

    print("KERNEL_OK")
</pallas_src>

<mosaic_0001>
module attributes {stable_mosaic.version = 11 : i64} {
  func.func @_matmul_stats_kernel(%arg0: i32, %arg1: memref<32x64xbf16, #tpu.memory_space<vmem>>, %arg2: memref<64x256xbf16, #tpu.memory_space<vmem>>, %arg3: memref<32x256xbf16, #tpu.memory_space<vmem>>, %arg4: memref<1x2x32x128xf32, #tpu.memory_space<vmem>>) attributes {dimension_semantics = [#tpu.dimension_semantics<parallel>], iteration_bounds = array<i64: 2>, scalar_prefetch = 0 : i64, scratch_operands = 0 : i64, tpu.core_type = #tpu.core_type<tc>, window_params = [{pipeline_mode = #tpu.pipeline_mode<synchronous>, transform_indices = @transform_0, window_bounds = array<i64: 32, 64>}, {transform_indices = @transform_1, window_bounds = array<i64: 64, 256>}, {transform_indices = @transform_2, window_bounds = array<i64: 32, 256>}, {transform_indices = @transform_3, window_bounds = array<i64: 1, 2, 32, 128>}]} {
    %c0 = arith.constant 0 : index
    %c0_0 = arith.constant 0 : index
    %0 = vector.load %arg1[%c0, %c0_0] : memref<32x64xbf16, #tpu.memory_space<vmem>>, vector<32x64xbf16>
    %c0_1 = arith.constant 0 : index
    %c0_2 = arith.constant 0 : index
    %1 = vector.load %arg2[%c0_1, %c0_2] : memref<64x256xbf16, #tpu.memory_space<vmem>>, vector<64x256xbf16>
    %cst = arith.constant dense<0.000000e+00> : vector<32x256xf32>
    %2 = tpu.matmul %0, %1, %cst {dimension_numbers = #tpu.dot_dimension_numbers<[1], [0], [0], [1], [0, 0, 1, 1], [], []>} : vector<32x64xbf16>, vector<64x256xbf16>, vector<32x256xf32> -> vector<32x256xf32>
    %cst_3 = arith.constant 0.000000e+00 : f32
    %3 = vector.broadcast %cst_3 : f32 to vector<32x128xf32>
    %cst_4 = arith.constant 0.000000e+00 : f32
    %4 = vector.broadcast %cst_4 : f32 to vector<32x128xf32>
    %5 = vector.extract_strided_slice %2 {offsets = [0, 0], sizes = [32, 128], strides = [1, 1]} : vector<32x256xf32> to vector<32x128xf32>
    %6 = arith.addf %3, %5 : vector<32x128xf32>
    %7 = arith.mulf %5, %5 : vector<32x128xf32>
    %8 = arith.addf %4, %7 : vector<32x128xf32>
    %9 = vector.extract_strided_slice %2 {offsets = [0, 128], sizes = [32, 128], strides = [1, 1]} : vector<32x256xf32> to vector<32x128xf32>
    %10 = arith.addf %6, %9 : vector<32x128xf32>
    %11 = arith.mulf %9, %9 : vector<32x128xf32>
    %12 = arith.addf %8, %11 : vector<32x128xf32>
    %c0_5 = arith.constant 0 : index
    %c0_6 = arith.constant 0 : index
    %c0_7 = arith.constant 0 : index
    %c0_8 = arith.constant 0 : index
    %13 = vector.load %arg4[%c0_5, %c0_6, %c0_7, %c0_8] : memref<1x2x32x128xf32, #tpu.memory_space<vmem>>, vector<1x1x32x128xf32>
    %14 = vector.shape_cast %13 : vector<1x1x32x128xf32> to vector<32x128xf32>
    %15 = vector.shape_cast %10 : vector<32x128xf32> to vector<1x1x32x128xf32>
    tpu.vector_store %arg4[%c0_5, %c0_6, %c0_7, %c0_8], %15 {strides = array<i32>} : memref<1x2x32x128xf32, #tpu.memory_space<vmem>>, vector<1x1x32x128xf32>,
    %c0_9 = arith.constant 0 : index
    %c1 = arith.constant 1 : index
    %c0_10 = arith.constant 0 : index
    %c0_11 = arith.constant 0 : index
    %16 = vector.load %arg4[%c0_9, %c1, %c0_10, %c0_11] : memref<1x2x32x128xf32, #tpu.memory_space<vmem>>, vector<1x1x32x128xf32>
    %17 = vector.shape_cast %16 : vector<1x1x32x128xf32> to vector<32x128xf32>
    %18 = vector.shape_cast %12 : vector<32x128xf32> to vector<1x1x32x128xf32>
    tpu.vector_store %arg4[%c0_9, %c1, %c0_10, %c0_11], %18 {strides = array<i32>} : memref<1x2x32x128xf32, #tpu.memory_space<vmem>>, vector<1x1x32x128xf32>,
    %19 = arith.truncf %2 : vector<32x256xf32> to vector<32x256xbf16>
    %c0_12 = arith.constant 0 : index
    %c0_13 = arith.constant 0 : index
    %20 = vector.load %arg3[%c0_12, %c0_13] : memref<32x256xbf16, #tpu.memory_space<vmem>>, vector<32x256xbf16>
    tpu.vector_store %arg3[%c0_12, %c0_13], %19 {strides = array<i32>} : memref<32x256xbf16, #tpu.memory_space<vmem>>, vector<32x256xbf16>,
    return
  }
  func.func @transform_0(%arg0: i32) -> (i32, i32) {
    %c0_i32 = arith.constant 0 : i32
    %c0_i32_0 = arith.constant 0 : i32
    %c0_i32_1 = arith.constant 0 : i32
    return %c0_i32, %c0_i32_0 : i32, i32
  }
  func.func @transform_1(%arg0: i32) -> (i32, i32) {
    %c0_i32 = arith.constant 0 : i32
    %c0_i32_0 = arith.constant 0 : i32
    return %c0_i32, %arg0 : i32, i32
  }
  func.func @transform_2(%arg0: i32) -> (i32, i32) {
    %c0_i32 = arith.constant 0 : i32
    %c0_i32_0 = arith.constant 0 : i32
    return %c0_i32, %arg0 : i32, i32
  }
  func.func @transform_3(%arg0: i32) -> (i32, i32, i32, i32) {
    %c0_i32 = arith.constant 0 : i32
    %c0_i32_0 = arith.constant 0 : i32
    %c0_i32_1 = arith.constant 0 : i32
    %c0_i32_2 = arith.constant 0 : i32
    return %arg0, %c0_i32, %c0_i32_0, %c0_i32_1 : i32, i32, i32, i32
  }
}

</mosaic_0001>

<llo_original>
// kernel: tpu_custom_call.1
$region0: #{tpu_custom_call.1}
  #allocation0 [shape = 'u32[]', space=smem, size = 0x4, offset = 0x4, fixed_abs, tag = 'smem constant byte address 0x4 - core index']
  #allocation1 [shape = 'u32[144,128]{1,0:T(1,128)}', space=vmem, size = 0x12000, scoped, tag = 'internal scratch']
  %s0 = inlined_call_operand.hbm [shape: bf16[32,64], index: 0, kind: input, shape index: {}]
  %s1 = inlined_call_operand.hbm [shape: bf16[64,512], index: 1, kind: input, shape index: {}]
  %s2 = inlined_call_operand.hbm [shape: bf16[32,512], index: 2, kind: output, shape index: {0}]
  %s3 = inlined_call_operand.hbm [shape: f32[2,2,32,128], index: 3, kind: output, shape index: {1}]
  %4 = xla_tuple %s2, %s3
  %s5 = sld [smem:[#allocation0]]
  $region57: #{tpu_custom_call.1} parent=0
    _
  %s7 = ssub.s32 1, %s5
  %s8 = scalar_select 0, %s7, %s5
  $region1: #{tpu_custom_call.1} parent=0
    #allocation2 [shape = 'u8[8192]{0}', space=vmem, size = 0x2000, scoped, tag = 'input window, operand 0, single buffered']
    #allocation3 [shape = 's32[2]{0}', space=sflag, size = 0x8, scoped, tag = 'scoped memory for tpu_custom_call.1']
    #allocation4 [shape = 's32[2]{0}', space=sflag, size = 0x8, scoped, tag = 'scoped memory for tpu_custom_call.1']
    #allocation5 [shape = 'u8[65536]{0}', space=vmem, size = 0x10000, scoped, tag = 'input window, operand 1']
    #allocation6 [shape = 's32[2]{0}', space=sflag, size = 0x8, scoped, tag = 'scoped memory for tpu_custom_call.1']
    #allocation7 [shape = 'u8[32768]{0}', space=vmem, size = 0x8000, scoped, tag = 'output window, operand 0']
    #allocation8 [shape = 'u8[65536]{0}', space=vmem, size = 0x10000, scoped, tag = 'output window, operand 1']
    #allocation9 [shape = 's32[2]{0}', space=sflag, size = 0x8, scoped, tag = 'scoped memory for tpu_custom_call.1']
    %9 = vsyncpa [#allocation3], 0
    %10 = vsyncpa [#allocation6], 0
    %s11 = scalar_lea.sflag [#allocation6], 1
    %12 = vsyncpa %s11, 0
    %13 = vsyncpa [#allocation4], 0
    %s14 = scalar_lea.sflag [#allocation4], 1
    %15 = vsyncpa %s14, 0
    %16 = vsyncpa [#allocation9], 0
    %s17 = scalar_lea.sflag [#allocation9], 1
    %18 = vsyncpa %s17, 0
    loop: start=0, step=1, limit=4
    $region2: #{tpu_custom_call.1} parent=1 // loop_pre_header
      _
    $region3: #{tpu_custom_call.1} parent=1 // loop_header
      %s20 = sphi 0, %s24
      %p21 = scmp.ge.s32.totalorder %s20, 4
      %s28 = sphi 0, %s28
      %s30 = sphi 0, %s28
      %s31 = sphi 0, %s30
      %s45 = sphi 0, %s31
      %s51 = sphi 0, %s53
      %s54 = sphi 0, %s51
      %s55 = sphi 0, %s54
      %s71 = sphi 0, %s55
      %s77 = sphi 0, %s79
      %s80 = sphi 0, %s77
      %s81 = sphi 0, %s80
      %s97 = sphi 0, %s81
      %s103 = sphi 0, %s105
      %s106 = sphi 0, %s103
      %s107 = sphi 0, %s106
      %s123 = sphi 0, %s107
    $region4: #{tpu_custom_call.1} parent=1 // loop_header_branch
      %23 = sbr.rel (%p21) target = $region8
    $region5: #{tpu_custom_call.1} parent=1 // loop_body
      %s25 = ssub.s32 %s20, 1
      %s26 = ssub.s32 %s20, 2
      %s27 = sadd.s32 %s20, 1
      %s29 = sadd.s32 %s28, 1
      %p32 = scmp.eq.s32.totalorder %s20, 1
      %p33 = scmp.ne.s32.totalorder %s28, %s30
      %p34 = scmp.eq.s32.totalorder %s20, 0
      %p35 = por %p33, %p34
      %p36 = scmp.ne.s32.totalorder %s28, %s30
      %p37 = scmp.eq.s32.totalorder %s25, 1
      %p38 = por %p36, %p37
      %p39 = scmp.ne.s32.totalorder %s30, %s31
      %p40 = scmp.eq.s32.totalorder %s25, 0
      %p41 = por %p39, %p40
      %p42 = scmp.ne.s32.totalorder %s30, %s31
      %p43 = scmp.eq.s32.totalorder %s26, 1
      %p44 = por %p42, %p43
      %p46 = scmp.ne.s32.totalorder %s31, %s45
      %p47 = scmp.eq.s32.totalorder %s26, 0
      %p48 = por %p46, %p47
      %s49 = ssub.s32 %s20, %s27
      %p50 = scmp.eq.s32.totalorder %s49, 0
      %s52 = sadd.s32 %s51, 1
      %s53 = scalar_select %p50, %s51, %s52
      %p56 = pneg %p50
      %p57 = scmp.eq.s32.totalorder %s20, 1
      %p58 = por %p56, %p57
      %p59 = scmp.ne.s32.totalorder %s51, %s54
      %p60 = scmp.eq.s32.totalorder %s20, 0
      %p61 = por %p59, %p60
      %p62 = scmp.ne.s32.totalorder %s51, %s54
      %p63 = scmp.eq.s32.totalorder %s25, 1
      %p64 = por %p62, %p63
      %p65 = scmp.ne.s32.totalorder %s54, %s55
      %p66 = scmp.eq.s32.totalorder %s25, 0
      %p67 = por %p65, %p66
      %p68 = scmp.ne.s32.totalorder %s54, %s55
      %p69 = scmp.eq.s32.totalorder %s26, 1
      %p70 = por %p68, %p69
      %p72 = scmp.ne.s32.totalorder %s55, %s71
      %p73 = scmp.eq.s32.totalorder %s26, 0
      %p74 = por %p72, %p73
      %s75 = ssub.s32 %s20, %s27
      %p76 = scmp.eq.s32.totalorder %s75, 0
      %s78 = sadd.s32 %s77, 1
      %s79 = scalar_select %p76, %s77, %s78
      %p82 = pneg %p76
      %p83 = scmp.eq.s32.totalorder %s20, 1
      %p84 = por %p82, %p83
      %p85 = scmp.ne.s32.totalorder %s77, %s80
      %p86 = scmp.eq.s32.totalorder %s20, 0
      %p87 = por %p85, %p86
      %p88 = scmp.ne.s32.totalorder %s77, %s80
      %p89 = scmp.eq.s32.totalorder %s25, 1
      %p90 = por %p88, %p89
      %p91 = scmp.ne.s32.totalorder %s80, %s81
      %p92 = scmp.eq.s32.totalorder %s25, 0
      %p93 = por %p91, %p92
      %p94 = scmp.ne.s32.totalorder %s80, %s81
      %p95 = scmp.eq.s32.totalorder %s26, 1
      %p96 = por %p94, %p95
      %p98 = scmp.ne.s32.totalorder %s81, %s97
      %p99 = scmp.eq.s32.totalorder %s26, 0
      %p100 = por %p98, %p99
      %s101 = ssub.s32 %s20, %s27
      %p102 = scmp.eq.s32.totalorder %s101, 0
      %s104 = sadd.s32 %s103, 1
      %s105 = scalar_select %p102, %s103, %s104
      %p108 = pneg %p102
      %p109 = scmp.eq.s32.totalorder %s20, 1
      %p110 = por %p108, %p109
      %p111 = scmp.ne.s32.totalorder %s103, %s106
      %p112 = scmp.eq.s32.totalorder %s20, 0
      %p113 = por %p111, %p112
      %p114 = scmp.ne.s32.totalorder %s103, %s106
      %p115 = scmp.eq.s32.totalorder %s25, 1
      %p116 = por %p114, %p115
      %p117 = scmp.ne.s32.totalorder %s106, %s107
      %p118 = scmp.eq.s32.totalorder %s25, 0
      %p119 = por %p117, %p118
      %p120 = scmp.ne.s32.totalorder %s106, %s107
      %p121 = scmp.eq.s32.totalorder %s26, 1
      %p122 = por %p120, %p121
      %p124 = scmp.ne.s32.totalorder %s107, %s123
      %p125 = scmp.eq.s32.totalorder %s26, 0
      %p126 = por %p124, %p125
      %p127 = scmp.le.s32.totalorder 1, %s20
      %p128 = scmp.lt.s32.totalorder %s20, 3
      %p129 = pnand %p127, %p128
      %p130 = pneg %p129
      // Predicated region
      $region9: #{tpu_custom_call.1} parent=5 // pred_check
        _
      $region10: #{tpu_custom_call.1} parent=5 // pred_check_branch
        %132 = sbr.rel (%p129) target = $region12
      $region11: #{tpu_custom_call.1} parent=5 // pred_region
        %s133 = ssub.s32 %s20, 1
        // Predicated region
        $region13: #{tpu_custom_call.1} parent=11 // pred_check
          %p134 = pneg %p41
        $region14: #{tpu_custom_call.1} parent=11 // pred_check_branch
          %136 = sbr.rel (%p134) target = $region16
        $region15: #{tpu_custom_call.1} parent=11 // pred_region
          %s138 = ssub.s32 256, 256
          %139 = vsyncadd [#allocation3], %s138
          %s140 = sshll.u32 [#allocation2], 4
          %s141 = int_to_ptr.vmem [resolvable:$true] %s140
          %146 = dma.hbm_to_vmem [thread:$0]  %s0, 256, %s141, [#allocation3], 64, 64, 4
        $region16: #{tpu_custom_call.1} parent=11 // pred_fallthru
          _
      $region12: #{tpu_custom_call.1} parent=5 // pred_fallthru
        _
      %p147 = scmp.lt.s32.totalorder %s20, 2
      // Predicated region
      $region17: #{tpu_custom_call.1} parent=5 // pred_check
        %p148 = pneg %p147
      $region18: #{tpu_custom_call.1} parent=5 // pred_check_branch
        %150 = sbr.rel (%p148) target = $region20
      $region19: #{tpu_custom_call.1} parent=5 // pred_region
        // Predicated region
        $region21: #{tpu_custom_call.1} parent=19 // pred_check
          %p151 = pneg %p61
        $region22: #{tpu_custom_call.1} parent=19 // pred_check_branch
          %153 = sbr.rel (%p151) target = $region24
        $region23: #{tpu_custom_call.1} parent=19 // pred_region
          %s154 = sand.u32 %s51, 1
          %s155 = scalar_lea.sflag [#allocation6], %s154
          %s156 = sand.u32 %s51, 1
          %s157 = smul.addr %s156, 64
          %s158 = scalar_lea.vmem [#allocation5], %s157
          %s159 = smul.u32 2, %s20
          %s161 = ssub.s32 1024, 1024
          %162 = vsyncadd %s155, %s161
          %s163 = smul.addr %s159, 64
          %s164 = scalar_lea.hbm %s1, %s163
          %s165 = sshll.u32 %s158, 4
          %s166 = int_to_ptr.vmem [resolvable:$true] %s165
          %171 = dma.hbm_to_vmem [thread:$0]  %s164, 1024, %s166, %s155, 256, 128, 8
        $region24: #{tpu_custom_call.1} parent=19 // pred_fallthru
          _
      $region20: #{tpu_custom_call.1} parent=5 // pred_fallthru
        _
      %p172 = scmp.le.s32.totalorder 1, %s20
      %p173 = scmp.lt.s32.totalorder %s20, 3
      %p174 = pnand %p172, %p173
      %p175 = pneg %p174
      // Predicated region
      $region25: #{tpu_custom_call.1} parent=5 // pred_check
        _
      $region26: #{tpu_custom_call.1} parent=5 // pred_check_branch
        %177 = sbr.rel (%p174) target = $region28
      $region27: #{tpu_custom_call.1} parent=5 // pred_region
        %s178 = ssub.s32 %s20, 1
        // Predicated region
        $region29: #{tpu_custom_call.1} parent=27 // pred_check
          %p179 = pneg %p41
        $region30: #{tpu_custom_call.1} parent=27 // pred_check_branch
          %181 = sbr.rel (%p179) target = $region32
        $region31: #{tpu_custom_call.1} parent=27 // pred_region
          %182 = dma.done [#allocation3], 256
        $region32: #{tpu_custom_call.1} parent=27 // pred_fallthru
          _
        %s183 = sand.u32 %s54, 1
        %s184 = scalar_lea.sflag [#allocation6], %s183
        %s185 = sand.u32 %s54, 1
        %s186 = smul.addr %s185, 64
        %s187 = scalar_lea.vmem [#allocation5], %s186
        // Predicated region
        $region33: #{tpu_custom_call.1} parent=27 // pred_check
          %p188 = pneg %p67
        $region34: #{tpu_custom_call.1} parent=27 // pred_check_branch
          %190 = sbr.rel (%p188) target = $region36
        $region35: #{tpu_custom_call.1} parent=27 // pred_region
          %191 = dma.done %s184, 1024
        $region36: #{tpu_custom_call.1} parent=27 // pred_fallthru
          _
        %p192 = pneg %p41
        %p193 = pneg %p38
        %s194 = sand.u32 %s54, 1
        %s195 = scalar_lea.sflag [#allocation6], %s194
        %s196 = sand.u32 %s54, 1
        %s197 = smul.addr %s196, 64
        %s198 = scalar_lea.vmem [#allocation5], %s197
        %p199 = pneg %p67
        %p200 = pneg %p64
        %p201 = pneg %p93
        %p202 = pneg %p90
        %s203 = sand.u32 %s80, 1
        %s204 = scalar_lea.sflag [#allocation4], %s203
        %s205 = sand.u32 %s80, 1
        %s206 = smul.addr %s205, 32
        %s207 = scalar_lea.vmem [#allocation7], %s206
        %p208 = pneg %p119
        %p209 = pneg %p116
        %s210 = sand.u32 %s106, 1
        %s211 = scalar_lea.sflag [#allocation9], %s210
        %s212 = sand.u32 %s106, 1
        %s213 = smul.addr %s212, 64
        %s214 = scalar_lea.vmem [#allocation8], %s213
        %s215 = smul.u32 2, %s25
        %s216 = smul.u32 2, %s25
        %v218 = vld [vmem:[#allocation2] sm:$0xf]
        %v219 = vld [vmem:[#allocation2 + $0x4] sm:$0xf]
        %v220 = vld [vmem:[#allocation2 + $0x8] sm:$0xf]
        %v221 = vld [vmem:[#allocation2 + $0xc] sm:$0xf]
        %v222 = vld [vmem:[%s187] sm:$0xff]
        %v223 = vld [vmem:[%s187 + $0x8] sm:$0xff]
        %v224 = vld [vmem:[%s187 + $0x10] sm:$0xff]
        %v225 = vld [vmem:[%s187 + $0x18] sm:$0xff]
        %v226 = vld [vmem:[%s187 + $0x20] sm:$0xff]
        %v227 = vld [vmem:[%s187 + $0x28] sm:$0xff]
        %v228 = vld [vmem:[%s187 + $0x30] sm:$0xff]
        %v229 = vld [vmem:[%s187 + $0x38] sm:$0xff]
        %v234 = vunpack.c.l.b16 %v218
        %v235 = vunpack.c.l.b16 %v219
        %v236 = vunpack.c.l.b16 %v220
        %v237 = vunpack.c.l.b16 %v221
        %v238 = vpack.c.b16 %v235, %v234
        %v239 = vpack.c.b16 %v237, %v236
        %v248 = vunpack.c.l.b16 %v222
        %v249 = vunpack.c.h.b16 %v222
        %v250 = vunpack.c.l.b16 %v223
        %v251 = vunpack.c.h.b16 %v223
        %v252 = vunpack.c.l.b16 %v224
        %v253 = vunpack.c.h.b16 %v224
        %v254 = vunpack.c.l.b16 %v225
        %v255 = vunpack.c.h.b16 %v225
        %v256 = vunpack.c.l.b16 %v226
        %v257 = vunpack.c.h.b16 %v226
        %v258 = vunpack.c.l.b16 %v227
        %v259 = vunpack.c.h.b16 %v227
        %v260 = vunpack.c.l.b16 %v228
        %v261 = vunpack.c.h.b16 %v228
        %v262 = vunpack.c.l.b16 %v229
        %v263 = vunpack.c.h.b16 %v229
        %v264 = vpack.c.b16 %v250, %v248
        %v265 = vpack.c.b16 %v251, %v249
        %v266 = vpack.c.b16 %v254, %v252
        %v267 = vpack.c.b16 %v255, %v253
        %v268 = vpack.c.b16 %v258, %v256
        %v269 = vpack.c.b16 %v259, %v257
        %v270 = vpack.c.b16 %v262, %v260
        %v271 = vpack.c.b16 %v263, %v261
        %vm280 = vcmask 523264
        %v282 = vsel %vm280, %v238, 0
        %v285 = vsel %vm280, %v239, 0
        %287 = vmatprep.subr.bf16.mxu0 %v265
        %288 = vmatpush1.bf16.msra.mxu0 %v264
        %289 = vmatprep.subr.bf16.mxu0 %v267
        %290 = vmatpush1.bf16.msra.mxu0 %v266
        %291 = vmatprep.subr.bf16.mxu0 %v269
        %292 = vmatpush1.bf16.msra.mxu0 %v268
        %293 = vmatprep.subr.bf16.mxu0 %v271
        %294 = vmatpush1.bf16.msra.mxu0 %v270
        %295 = vmatprep.subr.bf16.mxu0 0
        %296 = vmatpush1.bf16.msra.mxu0 0
        %297 = vmatprep.subr.bf16.mxu0 0
        %298 = vmatpush1.bf16.msra.mxu0 0
        %299 = vmatprep.subr.bf16.mxu0 0
        %300 = vmatpush1.bf16.msra.mxu0 0
        %301 = vmatprep.subr.bf16.mxu0 0
        %302 = vmatpush1.bf16.msra.mxu0 0
        %303 = vmatprep.subr.bf16.mxu0 0
        %304 = vmatpush1.bf16.msra.mxu0 0
        %305 = vmatprep.subr.bf16.mxu0 0
        %306 = vmatpush1.bf16.msra.mxu0 0
        %307 = vmatprep.subr.bf16.mxu0 0
        %308 = vmatpush1.bf16.msra.mxu0 0
        %309 = vmatprep.subr.bf16.mxu0 0
        %310 = vmatpush1.bf16.msra.mxu0 0
        %311 = vmatprep.subr.bf16.mxu0 0
        %312 = vmatpush1.bf16.msra.mxu0 0
        %313 = vmatprep.subr.bf16.mxu0 0
        %314 = vmatpush1.bf16.msra.mxu0 0
        %315 = vmatprep.subr.bf16.mxu0 0
        %316 = vmatpush1.bf16.msra.mxu0 0
        %317 = vmatprep.subr.bf16.mxu0 0
        %318 = vmatpush1.bf16.msra.mxu0 0
        %319 = vmatprep.mubr.bf16.mxu0 0
        %320 = vmatmul.mubr.bf16.gmra.mrb[0].mxu0 %v282
        %v321 = vpop.f32.mrb[0].mxu0
        %v322 = vadd.f32 0.0, %v321
        %v323 = vpop.f32.mrb[0].mxu0
        %v324 = vadd.f32 0.0, %v323
        %v325 = vpop.f32.mrb[0].mxu0
        %v326 = vadd.f32 0.0, %v325
        %v327 = vpop.f32.mrb[0].mxu0
        %v328 = vadd.f32 0.0, %v327
        %329 = vmatprep.mubr.bf16.mxu0 0
        %330 = vmatmul.mubr.bf16.gmra.mrb[0].mxu0 %v285
        %v331 = vpop.f32.mrb[0].mxu0
        %v332 = vadd.f32 0.0, %v331
        %v333 = vpop.f32.mrb[0].mxu0
        %v334 = vadd.f32 0.0, %v333
        %v335 = vpop.f32.mrb[0].mxu0
        %v336 = vadd.f32 0.0, %v335
        %v337 = vpop.f32.mrb[0].mxu0
        %v338 = vadd.f32 0.0, %v337
        %339 = vdwg.mxu0
        %v340 = vadd.f32 %v322, 0.0
        %v341 = vadd.f32 %v326, 0.0
        %v342 = vadd.f32 %v332, 0.0
        %v343 = vadd.f32 %v336, 0.0
        %v344 = vmul.f32 %v322, %v322
        %v345 = vmul.f32 %v326, %v326
        %v346 = vmul.f32 %v332, %v332
        %v347 = vmul.f32 %v336, %v336
        %v348 = vadd.f32 %v344, 0.0
        %v349 = vadd.f32 %v345, 0.0
        %v350 = vadd.f32 %v346, 0.0
        %v351 = vadd.f32 %v347, 0.0
        %v352 = vadd.f32 %v340, %v324
        %v353 = vadd.f32 %v341, %v328
        %v354 = vadd.f32 %v342, %v334
        %v355 = vadd.f32 %v343, %v338
        %v356 = vmul.f32 %v324, %v324
        %v357 = vmul.f32 %v328, %v328
        %v358 = vmul.f32 %v334, %v334
        %v359 = vmul.f32 %v338, %v338
        %v360 = vadd.f32 %v348, %v356
        %v361 = vadd.f32 %v349, %v357
        %v362 = vadd.f32 %v350, %v358
        %v363 = vadd.f32 %v351, %v359
        %364 = vst [vmem:[%s214] sm:$0xff] %v352
        %365 = vst [vmem:[%s214 + $0x8] sm:$0xff] %v353
        %366 = vst [vmem:[%s214 + $0x10] sm:$0xff] %v354
        %367 = vst [vmem:[%s214 + $0x18] sm:$0xff] %v355
        %s368 = scalar_lea.vmem %s214, 32 [#allocation8]
        %369 = vst [vmem:[%s368] sm:$0xff] %v360
        %370 = vst [vmem:[%s368 + $0x8] sm:$0xff] %v361
        %371 = vst [vmem:[%s368 + $0x10] sm:$0xff] %v362
        %372 = vst [vmem:[%s368 + $0x18] sm:$0xff] %v363
        %v373 = vpack.c.bf16 %v326, %v322
        %v374 = vpack.c.bf16 %v328, %v324
        %v375 = vpack.c.bf16 %v336, %v332
        %v376 = vpack.c.bf16 %v338, %v334
        %v381 = vunpack.c.l.b16 %v373
        %v382 = vunpack.c.l.b16 %v374
        %v383 = vunpack.c.h.b16 %v373
        %v384 = vunpack.c.h.b16 %v374
        %v385 = vunpack.c.l.b16 %v375
        %v386 = vunpack.c.l.b16 %v376
        %v387 = vunpack.c.h.b16 %v375
        %v388 = vunpack.c.h.b16 %v376
        %v389 = vpack.c.b16 %v382, %v381
        %v390 = vpack.c.b16 %v384, %v383
        %v391 = vpack.c.b16 %v386, %v385
        %v392 = vpack.c.b16 %v388, %v387
        %397 = vst [vmem:[%s207] sm:$0xff] %v389
        %398 = vst [vmem:[%s207 + $0x8] sm:$0xff] %v390
        %399 = vst [vmem:[%s207 + $0x10] sm:$0xff] %v391
        %400 = vst [vmem:[%s207 + $0x18] sm:$0xff] %v392
        %s401 = sand.u32 %s80, 1
        %s402 = scalar_lea.sflag [#allocation4], %s401
        %s403 = sand.u32 %s80, 1
        %s404 = smul.addr %s403, 32
        %s405 = scalar_lea.vmem [#allocation7], %s404
        %s406 = sand.u32 %s106, 1
        %s407 = scalar_lea.sflag [#allocation9], %s406
        %s408 = sand.u32 %s106, 1
        %s409 = smul.addr %s408, 64
        %s410 = scalar_lea.vmem [#allocation8], %s409
        // Predicated region
        $region37: #{tpu_custom_call.1} parent=27 // pred_check
          %p411 = pneg %p90
        $region38: #{tpu_custom_call.1} parent=27 // pred_check_branch
          %413 = sbr.rel (%p411) target = $region40
        $region39: #{tpu_custom_call.1} parent=27 // pred_region
          %s414 = smul.u32 2, %s25
          %s416 = ssub.s32 512, 512
          %417 = vsyncadd %s402, %s416
          %s418 = smul.addr %s414, 64
          %s419 = scalar_lea.hbm %s2, %s418
          %s420 = sshll.u32 %s405, 4
          %s421 = int_to_ptr.vmem [resolvable:$true] %s420
          %426 = dma.vmem_to_hbm [thread:$0]  %s421, 512, %s419, %s402, 128, 256, 8
        $region40: #{tpu_custom_call.1} parent=27 // pred_fallthru
          _
        // Predicated region
        $region41: #{tpu_custom_call.1} parent=27 // pred_check
          %p427 = pneg %p116
        $region42: #{tpu_custom_call.1} parent=27 // pred_check_branch
          %429 = sbr.rel (%p427) target = $region44
        $region43: #{tpu_custom_call.1} parent=27 // pred_region
          %s431 = ssub.s32 1024, 1024
          %432 = vsyncadd %s407, %s431
          %s433 = smul.addr %s25, 8
          %s434 = smul.addr %s433, 128
          %s435 = scalar_lea.hbm %s3, %s434
          %s436 = sshll.u32 %s410, 4
          %s437 = int_to_ptr.vmem [resolvable:$true] %s436
          %442 = dma.vmem_to_hbm [thread:$0]  %s437, 1024, %s435, %s407, 128, 128, 8
        $region44: #{tpu_custom_call.1} parent=27 // pred_fallthru
          _
      $region28: #{tpu_custom_call.1} parent=5 // pred_fallthru
        _
      %p443 = scmp.le.s32.totalorder 2, %s20
      // Predicated region
      $region45: #{tpu_custom_call.1} parent=5 // pred_check
        %p444 = pneg %p443
      $region46: #{tpu_custom_call.1} parent=5 // pred_check_branch
        %446 = sbr.rel (%p444) target = $region48
      $region47: #{tpu_custom_call.1} parent=5 // pred_region
        %s447 = ssub.s32 %s20, 2
        // Predicated region
        $region49: #{tpu_custom_call.1} parent=47 // pred_check
          %p448 = pneg %p96
        $region50: #{tpu_custom_call.1} parent=47 // pred_check_branch
          %450 = sbr.rel (%p448) target = $region52
        $region51: #{tpu_custom_call.1} parent=47 // pred_region
          %s451 = sand.u32 %s81, 1
          %s452 = scalar_lea.sflag [#allocation4], %s451
          %s453 = sand.u32 %s81, 1
          %s454 = smul.addr %s453, 32
          %s455 = scalar_lea.vmem [#allocation7], %s454
          %456 = dma.done %s452, 512
        $region52: #{tpu_custom_call.1} parent=47 // pred_fallthru
          _
        // Predicated region
        $region53: #{tpu_custom_call.1} parent=47 // pred_check
          %p457 = pneg %p122
        $region54: #{tpu_custom_call.1} parent=47 // pred_check_branch
          %459 = sbr.rel (%p457) target = $region56
        $region55: #{tpu_custom_call.1} parent=47 // pred_region
          %s460 = sand.u32 %s107, 1
          %s461 = scalar_lea.sflag [#allocation9], %s460
          %s462 = sand.u32 %s107, 1
          %s463 = smul.addr %s462, 64
          %s464 = scalar_lea.vmem [#allocation8], %s463
          %465 = dma.done %s461, 1024
        $region56: #{tpu_custom_call.1} parent=47 // pred_fallthru
          _
      $region48: #{tpu_custom_call.1} parent=5 // pred_fallthru
        _
    $region6: #{tpu_custom_call.1} parent=1 // loop_footer
      %s24 = sadd.s32 1, %s20
    $region7: #{tpu_custom_call.1} parent=1 // loop_footer_branch
      %19 = sbr.rel target = $region3
    $region8: #{tpu_custom_call.1} parent=1 // loop_exit
      _
    %466 = vsyncpa [#allocation3], 1
    %s467 = scalar_lea.sflag [#allocation3], 1
    %468 = vsyncpa %s467, 1
    %469 = vsyncpa [#allocation6], 1
    %s470 = scalar_lea.sflag [#allocation6], 1
    %471 = vsyncpa %s470, 1
    %472 = vsyncpa [#allocation4], 1
    %s473 = scalar_lea.sflag [#allocation4], 1
    %474 = vsyncpa %s473, 1
    %475 = vsyncpa [#allocation9], 1
    %s476 = scalar_lea.sflag [#allocation9], 1
    %477 = vsyncpa %s476, 1

</llo_original>
